<compile_context>
chip_gen: v6e
topology: v6e:2x2x1
jax: 0.10.0
libtpu: 0.0.40
codegen_flags: <defaults>
</compile_context>

<pallas_src>
import functools

import jax
import jax.numpy as jnp
from jax import lax
from jax.experimental import pallas as pl
from jax.experimental.pallas import tpu as pltpu


def block2_kernel(x_ref, wdw_ref, shift_ref, wpw_ref, o_ref, *, N, C, Cout, H, W):
    """Single grid step over the whole (tiny) problem.

    x_ref:     (N*C,  H*W)     input, spatial flattened onto lanes
    wdw_ref:   (9, N*C, 1)     depthwise 3x3 taps (BN scale folded), per sublane
    shift_ref: (N*C, 1)        folded BN shift, per sublane
    wpw_ref:   (C, Cout, 1)    pointwise 1x1 weights, per output sublane
    o_ref:     (N*Cout, H*W)   output, lane-dense
    """
    HW = H * W
    x = x_ref[...]                                        # (N*C, HW) f32

    # Lane-position iotas for the 3x3 halo masks (zero "SAME" padding).
    lane = lax.broadcasted_iota(jnp.int32, (1, HW), 1)
    if W & (W - 1) == 0:                                  # power-of-two fast path
        col = lane & (W - 1)
    else:
        col = lane % W

    # Depthwise 3x3, stride 1: nine masked lane rotations + per-sublane FMAs.
    acc = jnp.zeros((N * C, HW), jnp.float32)
    t = 0
    for dh in (-1, 0, 1):
        for dw in (-1, 0, 1):
            delta = dh * W + dw
            if delta == 0:
                shifted = x
            else:
                shifted = pltpu.roll(x, shift=(-delta) % HW, axis=1)
            conds = []
            if dh == -1:
                conds.append(lane >= W)                   # row >= 1
            elif dh == 1:
                conds.append(lane < (H - 1) * W)          # row <= H-2
            if dw == -1:
                conds.append(col >= 1)
            elif dw == 1:
                conds.append(col < W - 1)
            if conds:
                valid = conds[0]
                for extra in conds[1:]:
                    valid = valid & extra
                shifted = jnp.where(valid, shifted, 0.0)
            acc = acc + shifted * wdw_ref[t]              # (N*C, 1) lane-broadcast
            t += 1

    # BatchNorm shift (scale already folded into the taps) + ReLU.
    y = jnp.maximum(acc + shift_ref[...], 0.0)            # (N*C, HW)

    # Pointwise 1x1 conv + ReLU: unrolled per-channel FMAs on the VPU.
    for n in range(N):
        out_n = jnp.zeros((Cout, HW), jnp.float32)
        for c in range(C):
            yc = y[n * C + c:n * C + c + 1, :]            # (1, HW) -> bcast over Cout rows
            out_n = out_n + yc * wpw_ref[c]               # (Cout, 1) lane-broadcast
        o_ref[n * Cout:(n + 1) * Cout, :] = jnp.maximum(out_n, 0.0).astype(o_ref.dtype)


@jax.jit
def block2_pallas(x_nchw, w_dw, bn_scale, bn_shift, w_pw):
    """x_nchw: (N, C, H, W) f32; w_dw: (3,3,C); w_pw: (C, Cout). Returns (N, Cout, H, W)."""
    N, C, H, W = x_nchw.shape
    Cout = w_pw.shape[1]
    HW = H * W

    # Contiguous (free) reshape only -- no NCHW->NHWC transpose, no jnp.pad.
    x2d = x_nchw.reshape(N * C, HW).astype(jnp.float32)

    # Fold BN scale into the depthwise taps; tile per-channel params over N so
    # they become per-sublane scalars for the (N*C, HW) layout.
    wdw_taps = (w_dw * bn_scale).reshape(9, C).astype(jnp.float32)       # (9, C)
    wdw_rows = jnp.tile(wdw_taps, (1, N)).reshape(9, N * C, 1)           # (9, N*C, 1)
    shift_rows = jnp.tile(bn_shift.astype(jnp.float32), (N,)).reshape(N * C, 1)
    wpw_cols = w_pw.astype(jnp.float32).reshape(C, Cout, 1)              # (C, Cout, 1)

    kernel = functools.partial(block2_kernel, N=N, C=C, Cout=Cout, H=H, W=W)

    out2d = pl.pallas_call(
        kernel,
        out_shape=jax.ShapeDtypeStruct((N * Cout, HW), jnp.float32),
        grid_spec=pltpu.PrefetchScalarGridSpec(
            num_scalar_prefetch=0,
            grid=(1,),                         # whole problem in one step (~10 KB)
            in_specs=[
                pl.BlockSpec((N * C, HW), lambda i: (0, 0)),
                pl.BlockSpec((9, N * C, 1), lambda i: (0, 0, 0)),
                pl.BlockSpec((N * C, 1), lambda i: (0, 0)),
                pl.BlockSpec((C, Cout, 1), lambda i: (0, 0, 0)),
            ],
            out_specs=pl.BlockSpec((N * Cout, HW), lambda i: (0, 0)),
        ),
        compiler_params=pltpu.CompilerParams(
            dimension_semantics=("arbitrary",)),
    )(x2d, wdw_rows, shift_rows, wpw_cols)

    # Contiguous (free) reshape back to PyTorch's NCHW output layout.
    return out2d.reshape(N, Cout, H, W)


def block2_reference(x_nchw, w_dw, bn_scale, bn_shift, w_pw):
    """Pure-JAX reference (same semantics) for correctness checking."""
    C = x_nchw.shape[1]
    x = jnp.transpose(x_nchw, (0, 2, 3, 1))  # NHWC
    dw = lax.conv_general_dilated(
        x, w_dw.reshape(3, 3, 1, C), window_strides=(1, 1), padding="SAME",
        dimension_numbers=("NHWC", "HWIO", "NHWC"), feature_group_count=C,
        precision=lax.Precision.HIGHEST)
    y = jnp.maximum(dw * bn_scale + bn_shift, 0.0)
    z = jnp.maximum(jnp.einsum("nhwc,co->nhwo", y, w_pw,
                               precision=lax.Precision.HIGHEST), 0.0)
    return jnp.transpose(z, (0, 3, 1, 2))


if __name__ == "__main__":
    key = jax.random.PRNGKey(0)
    k_x, k_dw, k_pw = jax.random.split(key, 3)

    N, Cin, H, W = 2, 4, 16, 16
    Cout = 8
    eps = 1e-5

    x = jax.random.normal(k_x, (N, Cin, H, W), dtype=jnp.float32)

    # Depthwise 3x3 weights, stored (kh, kw, C)  (PyTorch shape: (C, 1, 3, 3)).
    w_dw = jax.random.normal(k_dw, (3, 3, Cin), dtype=jnp.float32) * 0.2
    # Pointwise 1x1 weights, stored (Cin, Cout)  (PyTorch shape: (Cout, Cin, 1, 1)).
    w_pw = jax.random.normal(k_pw, (Cin, Cout), dtype=jnp.float32) * 0.2

    # BatchNorm2d(in_planes) eval-mode parameters (PyTorch defaults).
    gamma = jnp.ones((Cin,), jnp.float32)
    beta = jnp.zeros((Cin,), jnp.float32)
    running_mean = jnp.zeros((Cin,), jnp.float32)
    running_var = jnp.ones((Cin,), jnp.float32)
    bn_scale = gamma / jnp.sqrt(running_var + eps)
    bn_shift = beta - running_mean * bn_scale

    out = block2_pallas(x, w_dw, bn_scale, bn_shift, w_pw)
    out = jax.block_until_ready(out)

    ref = block2_reference(x, w_dw, bn_scale, bn_shift, w_pw)
    assert out.shape == (N, Cout, H, W), out.shape
    assert jnp.allclose(out, ref, atol=1e-4, rtol=1e-4), "mismatch vs reference"

    print("KERNEL_OK")
</pallas_src>

<mosaic_0001>
module attributes {stable_mosaic.version = 11 : i64} {
  func.func @block2_kernel(%arg0: i32, %arg1: memref<8x256xf32, #tpu.memory_space<vmem>>, %arg2: memref<9x8x1xf32, #tpu.memory_space<vmem>>, %arg3: memref<8x1xf32, #tpu.memory_space<vmem>>, %arg4: memref<4x8x1xf32, #tpu.memory_space<vmem>>, %arg5: memref<16x256xf32, #tpu.memory_space<vmem>>) attributes {dimension_semantics = [#tpu.dimension_semantics<arbitrary>], iteration_bounds = array<i64: 1>, scalar_prefetch = 0 : i64, scratch_operands = 0 : i64, tpu.core_type = #tpu.core_type<tc>, window_params = [{pipeline_mode = #tpu.pipeline_mode<synchronous>, transform_indices = @transform_0, window_bounds = array<i64: 8, 256>}, {pipeline_mode = #tpu.pipeline_mode<synchronous>, transform_indices = @transform_1, window_bounds = array<i64: 9, 8, 1>}, {pipeline_mode = #tpu.pipeline_mode<synchronous>, transform_indices = @transform_2, window_bounds = array<i64: 8, 1>}, {pipeline_mode = #tpu.pipeline_mode<synchronous>, transform_indices = @transform_3, window_bounds = array<i64: 4, 8, 1>}, {pipeline_mode = #tpu.pipeline_mode<synchronous>, transform_indices = @transform_4, window_bounds = array<i64: 16, 256>}]} {
    %c0 = arith.constant 0 : index
    %c0_0 = arith.constant 0 : index
    %0 = vector.load %arg1[%c0, %c0_0] : memref<8x256xf32, #tpu.memory_space<vmem>>, vector<8x256xf32>
    %1 = tpu.iota {dimensions = array<i32: 1>} : vector<1x256xi32>
    %c15_i32 = arith.constant 15 : i32
    %2 = vector.broadcast %c15_i32 : i32 to vector<1x256xi32>
    %3 = arith.andi %1, %2 : vector<1x256xi32>
    %cst = arith.constant 0.000000e+00 : f32
    %4 = vector.broadcast %cst : f32 to vector<8x256xf32>
    %c17_i32 = arith.constant 17 : i32
    %5 = tpu.dynamic_rotate %0 by %c17_i32 dim 1 : vector<8x256xf32>, i32 -> vector<8x256xf32>
    %c16_i32 = arith.constant 16 : i32
    %6 = vector.broadcast %c16_i32 : i32 to vector<1x256xi32>
    %7 = arith.cmpi sge, %1, %6 : vector<1x256xi32>
    %c1_i32 = arith.constant 1 : i32
    %8 = vector.broadcast %c1_i32 : i32 to vector<1x256xi32>
    %9 = arith.cmpi sge, %3, %8 : vector<1x256xi32>
    %10 = arith.andi %7, %9 : vector<1x256xi1>
    %cst_1 = arith.constant 0.000000e+00 : f32
    %11 = vector.shape_cast %10 : vector<1x256xi1> to vector<1x256xi1>
    %12 = vector.broadcast %11 : vector<1x256xi1> to vector<8x256xi1>
    %13 = vector.broadcast %cst_1 : f32 to vector<8x256xf32>
    %14 = arith.select %12, %5, %13 : vector<8x256xi1>, vector<8x256xf32>
    %c0_2 = arith.constant 0 : index
    %c0_3 = arith.constant 0 : index
    %c0_4 = arith.constant 0 : index
    %15 = vector.load %arg2[%c0_2, %c0_3, %c0_4] : memref<9x8x1xf32, #tpu.memory_space<vmem>>, vector<1x8x1xf32>
    %16 = vector.shape_cast %15 : vector<1x8x1xf32> to vector<8x1xf32>
    %17 = vector.broadcast %16 : vector<8x1xf32> to vector<8x256xf32>
    %18 = arith.mulf %14, %17 : vector<8x256xf32>
    %19 = arith.addf %4, %18 : vector<8x256xf32>
    %c16_i32_5 = arith.constant 16 : i32
    %20 = tpu.dynamic_rotate %0 by %c16_i32_5 dim 1 : vector<8x256xf32>, i32 -> vector<8x256xf32>
    %c16_i32_6 = arith.constant 16 : i32
    %21 = vector.broadcast %c16_i32_6 : i32 to vector<1x256xi32>
    %22 = arith.cmpi sge, %1, %21 : vector<1x256xi32>
    %cst_7 = arith.constant 0.000000e+00 : f32
    %23 = vector.shape_cast %22 : vector<1x256xi1> to vector<1x256xi1>
    %24 = vector.broadcast %23 : vector<1x256xi1> to vector<8x256xi1>
    %25 = vector.broadcast %cst_7 : f32 to vector<8x256xf32>
    %26 = arith.select %24, %20, %25 : vector<8x256xi1>, vector<8x256xf32>
    %c1 = arith.constant 1 : index
    %c0_8 = arith.constant 0 : index
    %c0_9 = arith.constant 0 : index
    %27 = vector.load %arg2[%c1, %c0_8, %c0_9] : memref<9x8x1xf32, #tpu.memory_space<vmem>>, vector<1x8x1xf32>
    %28 = vector.shape_cast %27 : vector<1x8x1xf32> to vector<8x1xf32>
    %29 = vector.broadcast %28 : vector<8x1xf32> to vector<8x256xf32>
    %30 = arith.mulf %26, %29 : vector<8x256xf32>
    %31 = arith.addf %19, %30 : vector<8x256xf32>
    %c15_i32_10 = arith.constant 15 : i32
    %32 = tpu.dynamic_rotate %0 by %c15_i32_10 dim 1 : vector<8x256xf32>, i32 -> vector<8x256xf32>
    %c16_i32_11 = arith.constant 16 : i32
    %33 = vector.broadcast %c16_i32_11 : i32 to vector<1x256xi32>
    %34 = arith.cmpi sge, %1, %33 : vector<1x256xi32>
    %c15_i32_12 = arith.constant 15 : i32
    %35 = vector.broadcast %c15_i32_12 : i32 to vector<1x256xi32>
    %36 = arith.cmpi slt, %3, %35 : vector<1x256xi32>
    %37 = arith.andi %34, %36 : vector<1x256xi1>
    %cst_13 = arith.constant 0.000000e+00 : f32
    %38 = vector.shape_cast %37 : vector<1x256xi1> to vector<1x256xi1>
    %39 = vector.broadcast %38 : vector<1x256xi1> to vector<8x256xi1>
    %40 = vector.broadcast %cst_13 : f32 to vector<8x256xf32>
    %41 = arith.select %39, %32, %40 : vector<8x256xi1>, vector<8x256xf32>
    %c2 = arith.constant 2 : index
    %c0_14 = arith.constant 0 : index
    %c0_15 = arith.constant 0 : index
    %42 = vector.load %arg2[%c2, %c0_14, %c0_15] : memref<9x8x1xf32, #tpu.memory_space<vmem>>, vector<1x8x1xf32>
    %43 = vector.shape_cast %42 : vector<1x8x1xf32> to vector<8x1xf32>
    %44 = vector.broadcast %43 : vector<8x1xf32> to vector<8x256xf32>
    %45 = arith.mulf %41, %44 : vector<8x256xf32>
    %46 = arith.addf %31, %45 : vector<8x256xf32>
    %c1_i32_16 = arith.constant 1 : i32
    %47 = tpu.dynamic_rotate %0 by %c1_i32_16 dim 1 : vector<8x256xf32>, i32 -> vector<8x256xf32>
    %c1_i32_17 = arith.constant 1 : i32
    %48 = vector.broadcast %c1_i32_17 : i32 to vector<1x256xi32>
    %49 = arith.cmpi sge, %3, %48 : vector<1x256xi32>
    %cst_18 = arith.constant 0.000000e+00 : f32
    %50 = vector.shape_cast %49 : vector<1x256xi1> to vector<1x256xi1>
    %51 = vector.broadcast %50 : vector<1x256xi1> to vector<8x256xi1>
    %52 = vector.broadcast %cst_18 : f32 to vector<8x256xf32>
    %53 = arith.select %51, %47, %52 : vector<8x256xi1>, vector<8x256xf32>
    %c3 = arith.constant 3 : index
    %c0_19 = arith.constant 0 : index
    %c0_20 = arith.constant 0 : index
    %54 = vector.load %arg2[%c3, %c0_19, %c0_20] : memref<9x8x1xf32, #tpu.memory_space<vmem>>, vector<1x8x1xf32>
    %55 = vector.shape_cast %54 : vector<1x8x1xf32> to vector<8x1xf32>
    %56 = vector.broadcast %55 : vector<8x1xf32> to vector<8x256xf32>
    %57 = arith.mulf %53, %56 : vector<8x256xf32>
    %58 = arith.addf %46, %57 : vector<8x256xf32>
    %c4 = arith.constant 4 : index
    %c0_21 = arith.constant 0 : index
    %c0_22 = arith.constant 0 : index
    %59 = vector.load %arg2[%c4, %c0_21, %c0_22] : memref<9x8x1xf32, #tpu.memory_space<vmem>>, vector<1x8x1xf32>
    %60 = vector.shape_cast %59 : vector<1x8x1xf32> to vector<8x1xf32>
    %61 = vector.broadcast %60 : vector<8x1xf32> to vector<8x256xf32>
    %62 = arith.mulf %0, %61 : vector<8x256xf32>
    %63 = arith.addf %58, %62 : vector<8x256xf32>
    %c255_i32 = arith.constant 255 : i32
    %64 = tpu.dynamic_rotate %0 by %c255_i32 dim 1 : vector<8x256xf32>, i32 -> vector<8x256xf32>
    %c15_i32_23 = arith.constant 15 : i32
    %65 = vector.broadcast %c15_i32_23 : i32 to vector<1x256xi32>
    %66 = arith.cmpi slt, %3, %65 : vector<1x256xi32>
    %cst_24 = arith.constant 0.000000e+00 : f32
    %67 = vector.shape_cast %66 : vector<1x256xi1> to vector<1x256xi1>
    %68 = vector.broadcast %67 : vector<1x256xi1> to vector<8x256xi1>
    %69 = vector.broadcast %cst_24 : f32 to vector<8x256xf32>
    %70 = arith.select %68, %64, %69 : vector<8x256xi1>, vector<8x256xf32>
    %c5 = arith.constant 5 : index
    %c0_25 = arith.constant 0 : index
    %c0_26 = arith.constant 0 : index
    %71 = vector.load %arg2[%c5, %c0_25, %c0_26] : memref<9x8x1xf32, #tpu.memory_space<vmem>>, vector<1x8x1xf32>
    %72 = vector.shape_cast %71 : vector<1x8x1xf32> to vector<8x1xf32>
    %73 = vector.broadcast %72 : vector<8x1xf32> to vector<8x256xf32>
    %74 = arith.mulf %70, %73 : vector<8x256xf32>
    %75 = arith.addf %63, %74 : vector<8x256xf32>
    %c241_i32 = arith.constant 241 : i32
    %76 = tpu.dynamic_rotate %0 by %c241_i32 dim 1 : vector<8x256xf32>, i32 -> vector<8x256xf32>
    %c240_i32 = arith.constant 240 : i32
    %77 = vector.broadcast %c240_i32 : i32 to vector<1x256xi32>
    %78 = arith.cmpi slt, %1, %77 : vector<1x256xi32>
    %c1_i32_27 = arith.constant 1 : i32
    %79 = vector.broadcast %c1_i32_27 : i32 to vector<1x256xi32>
    %80 = arith.cmpi sge, %3, %79 : vector<1x256xi32>
    %81 = arith.andi %78, %80 : vector<1x256xi1>
    %cst_28 = arith.constant 0.000000e+00 : f32
    %82 = vector.shape_cast %81 : vector<1x256xi1> to vector<1x256xi1>
    %83 = vector.broadcast %82 : vector<1x256xi1> to vector<8x256xi1>
    %84 = vector.broadcast %cst_28 : f32 to vector<8x256xf32>
    %85 = arith.select %83, %76, %84 : vector<8x256xi1>, vector<8x256xf32>
    %c6 = arith.constant 6 : index
    %c0_29 = arith.constant 0 : index
    %c0_30 = arith.constant 0 : index
    %86 = vector.load %arg2[%c6, %c0_29, %c0_30] : memref<9x8x1xf32, #tpu.memory_space<vmem>>, vector<1x8x1xf32>
    %87 = vector.shape_cast %86 : vector<1x8x1xf32> to vector<8x1xf32>
    %88 = vector.broadcast %87 : vector<8x1xf32> to vector<8x256xf32>
    %89 = arith.mulf %85, %88 : vector<8x256xf32>
    %90 = arith.addf %75, %89 : vector<8x256xf32>
    %c240_i32_31 = arith.constant 240 : i32
    %91 = tpu.dynamic_rotate %0 by %c240_i32_31 dim 1 : vector<8x256xf32>, i32 -> vector<8x256xf32>
    %c240_i32_32 = arith.constant 240 : i32
    %92 = vector.broadcast %c240_i32_32 : i32 to vector<1x256xi32>
    %93 = arith.cmpi slt, %1, %92 : vector<1x256xi32>
    %cst_33 = arith.constant 0.000000e+00 : f32
    %94 = vector.shape_cast %93 : vector<1x256xi1> to vector<1x256xi1>
    %95 = vector.broadcast %94 : vector<1x256xi1> to vector<8x256xi1>
    %96 = vector.broadcast %cst_33 : f32 to vector<8x256xf32>
    %97 = arith.select %95, %91, %96 : vector<8x256xi1>, vector<8x256xf32>
    %c7 = arith.constant 7 : index
    %c0_34 = arith.constant 0 : index
    %c0_35 = arith.constant 0 : index
    %98 = vector.load %arg2[%c7, %c0_34, %c0_35] : memref<9x8x1xf32, #tpu.memory_space<vmem>>, vector<1x8x1xf32>
    %99 = vector.shape_cast %98 : vector<1x8x1xf32> to vector<8x1xf32>
    %100 = vector.broadcast %99 : vector<8x1xf32> to vector<8x256xf32>
    %101 = arith.mulf %97, %100 : vector<8x256xf32>
    %102 = arith.addf %90, %101 : vector<8x256xf32>
    %c239_i32 = arith.constant 239 : i32
    %103 = tpu.dynamic_rotate %0 by %c239_i32 dim 1 : vector<8x256xf32>, i32 -> vector<8x256xf32>
    %c240_i32_36 = arith.constant 240 : i32
    %104 = vector.broadcast %c240_i32_36 : i32 to vector<1x256xi32>
    %105 = arith.cmpi slt, %1, %104 : vector<1x256xi32>
    %c15_i32_37 = arith.constant 15 : i32
    %106 = vector.broadcast %c15_i32_37 : i32 to vector<1x256xi32>
    %107 = arith.cmpi slt, %3, %106 : vector<1x256xi32>
    %108 = arith.andi %105, %107 : vector<1x256xi1>
    %cst_38 = arith.constant 0.000000e+00 : f32
    %109 = vector.shape_cast %108 : vector<1x256xi1> to vector<1x256xi1>
    %110 = vector.broadcast %109 : vector<1x256xi1> to vector<8x256xi1>
    %111 = vector.broadcast %cst_38 : f32 to vector<8x256xf32>
    %112 = arith.select %110, %103, %111 : vector<8x256xi1>, vector<8x256xf32>
    %c8 = arith.constant 8 : index
    %c0_39 = arith.constant 0 : index
    %c0_40 = arith.constant 0 : index
    %113 = vector.load %arg2[%c8, %c0_39, %c0_40] : memref<9x8x1xf32, #tpu.memory_space<vmem>>, vector<1x8x1xf32>
    %114 = vector.shape_cast %113 : vector<1x8x1xf32> to vector<8x1xf32>
    %115 = vector.broadcast %114 : vector<8x1xf32> to vector<8x256xf32>
    %116 = arith.mulf %112, %115 : vector<8x256xf32>
    %117 = arith.addf %102, %116 : vector<8x256xf32>
    %c0_41 = arith.constant 0 : index
    %c0_42 = arith.constant 0 : index
    %118 = vector.load %arg3[%c0_41, %c0_42] : memref<8x1xf32, #tpu.memory_space<vmem>>, vector<8x1xf32>
    %119 = vector.broadcast %118 : vector<8x1xf32> to vector<8x256xf32>
    %120 = arith.addf %117, %119 : vector<8x256xf32>
    %cst_43 = arith.constant 0.000000e+00 : f32
    %121 = vector.broadcast %cst_43 : f32 to vector<8x256xf32>
    %122 = arith.maximumf %120, %121 : vector<8x256xf32>
    %cst_44 = arith.constant 0.000000e+00 : f32
    %123 = vector.broadcast %cst_44 : f32 to vector<8x256xf32>
    %124 = vector.extract_strided_slice %122 {offsets = [0, 0], sizes = [1, 256], strides = [1, 1]} : vector<8x256xf32> to vector<1x256xf32>
    %c0_45 = arith.constant 0 : index
    %c0_46 = arith.constant 0 : index
    %c0_47 = arith.constant 0 : index
    %125 = vector.load %arg4[%c0_45, %c0_46, %c0_47] : memref<4x8x1xf32, #tpu.memory_space<vmem>>, vector<1x8x1xf32>
    %126 = vector.shape_cast %125 : vector<1x8x1xf32> to vector<8x1xf32>
    %127 = vector.broadcast %124 : vector<1x256xf32> to vector<8x256xf32>
    %128 = vector.broadcast %126 : vector<8x1xf32> to vector<8x256xf32>
    %129 = arith.mulf %127, %128 : vector<8x256xf32>
    %130 = arith.addf %123, %129 : vector<8x256xf32>
    %131 = vector.extract_strided_slice %122 {offsets = [1, 0], sizes = [1, 256], strides = [1, 1]} : vector<8x256xf32> to vector<1x256xf32>
    %c1_48 = arith.constant 1 : index
    %c0_49 = arith.constant 0 : index
    %c0_50 = arith.constant 0 : index
    %132 = vector.load %arg4[%c1_48, %c0_49, %c0_50] : memref<4x8x1xf32, #tpu.memory_space<vmem>>, vector<1x8x1xf32>
    %133 = vector.shape_cast %132 : vector<1x8x1xf32> to vector<8x1xf32>
    %134 = vector.broadcast %131 : vector<1x256xf32> to vector<8x256xf32>
    %135 = vector.broadcast %133 : vector<8x1xf32> to vector<8x256xf32>
    %136 = arith.mulf %134, %135 : vector<8x256xf32>
    %137 = arith.addf %130, %136 : vector<8x256xf32>
    %138 = vector.extract_strided_slice %122 {offsets = [2, 0], sizes = [1, 256], strides = [1, 1]} : vector<8x256xf32> to vector<1x256xf32>
    %c2_51 = arith.constant 2 : index
    %c0_52 = arith.constant 0 : index
    %c0_53 = arith.constant 0 : index
    %139 = vector.load %arg4[%c2_51, %c0_52, %c0_53] : memref<4x8x1xf32, #tpu.memory_space<vmem>>, vector<1x8x1xf32>
    %140 = vector.shape_cast %139 : vector<1x8x1xf32> to vector<8x1xf32>
    %141 = vector.broadcast %138 : vector<1x256xf32> to vector<8x256xf32>
    %142 = vector.broadcast %140 : vector<8x1xf32> to vector<8x256xf32>
    %143 = arith.mulf %141, %142 : vector<8x256xf32>
    %144 = arith.addf %137, %143 : vector<8x256xf32>
    %145 = vector.extract_strided_slice %122 {offsets = [3, 0], sizes = [1, 256], strides = [1, 1]} : vector<8x256xf32> to vector<1x256xf32>
    %c3_54 = arith.constant 3 : index
    %c0_55 = arith.constant 0 : index
    %c0_56 = arith.constant 0 : index
    %146 = vector.load %arg4[%c3_54, %c0_55, %c0_56] : memref<4x8x1xf32, #tpu.memory_space<vmem>>, vector<1x8x1xf32>
    %147 = vector.shape_cast %146 : vector<1x8x1xf32> to vector<8x1xf32>
    %148 = vector.broadcast %145 : vector<1x256xf32> to vector<8x256xf32>
    %149 = vector.broadcast %147 : vector<8x1xf32> to vector<8x256xf32>
    %150 = arith.mulf %148, %149 : vector<8x256xf32>
    %151 = arith.addf %144, %150 : vector<8x256xf32>
    %cst_57 = arith.constant 0.000000e+00 : f32
    %152 = vector.broadcast %cst_57 : f32 to vector<8x256xf32>
    %153 = arith.maximumf %151, %152 : vector<8x256xf32>
    %c0_58 = arith.constant 0 : index
    %c0_59 = arith.constant 0 : index
    %154 = vector.load %arg5[%c0_58, %c0_59] : memref<16x256xf32, #tpu.memory_space<vmem>>, vector<8x256xf32>
    tpu.vector_store %arg5[%c0_58, %c0_59], %153 {strides = array<i32>} : memref<16x256xf32, #tpu.memory_space<vmem>>, vector<8x256xf32>,
    %cst_60 = arith.constant 0.000000e+00 : f32
    %155 = vector.broadcast %cst_60 : f32 to vector<8x256xf32>
    %156 = vector.extract_strided_slice %122 {offsets = [4, 0], sizes = [1, 256], strides = [1, 1]} : vector<8x256xf32> to vector<1x256xf32>
    %c0_61 = arith.constant 0 : index
    %c0_62 = arith.constant 0 : index
    %c0_63 = arith.constant 0 : index
    %157 = vector.load %arg4[%c0_61, %c0_62, %c0_63] : memref<4x8x1xf32, #tpu.memory_space<vmem>>, vector<1x8x1xf32>
    %158 = vector.shape_cast %157 : vector<1x8x1xf32> to vector<8x1xf32>
    %159 = vector.broadcast %156 : vector<1x256xf32> to vector<8x256xf32>
    %160 = vector.broadcast %158 : vector<8x1xf32> to vector<8x256xf32>
    %161 = arith.mulf %159, %160 : vector<8x256xf32>
    %162 = arith.addf %155, %161 : vector<8x256xf32>
    %163 = vector.extract_strided_slice %122 {offsets = [5, 0], sizes = [1, 256], strides = [1, 1]} : vector<8x256xf32> to vector<1x256xf32>
    %c1_64 = arith.constant 1 : index
    %c0_65 = arith.constant 0 : index
    %c0_66 = arith.constant 0 : index
    %164 = vector.load %arg4[%c1_64, %c0_65, %c0_66] : memref<4x8x1xf32, #tpu.memory_space<vmem>>, vector<1x8x1xf32>
    %165 = vector.shape_cast %164 : vector<1x8x1xf32> to vector<8x1xf32>
    %166 = vector.broadcast %163 : vector<1x256xf32> to vector<8x256xf32>
    %167 = vector.broadcast %165 : vector<8x1xf32> to vector<8x256xf32>
    %168 = arith.mulf %166, %167 : vector<8x256xf32>
    %169 = arith.addf %162, %168 : vector<8x256xf32>
    %170 = vector.extract_strided_slice %122 {offsets = [6, 0], sizes = [1, 256], strides = [1, 1]} : vector<8x256xf32> to vector<1x256xf32>
    %c2_67 = arith.constant 2 : index
    %c0_68 = arith.constant 0 : index
    %c0_69 = arith.constant 0 : index
    %171 = vector.load %arg4[%c2_67, %c0_68, %c0_69] : memref<4x8x1xf32, #tpu.memory_space<vmem>>, vector<1x8x1xf32>
    %172 = vector.shape_cast %171 : vector<1x8x1xf32> to vector<8x1xf32>
    %173 = vector.broadcast %170 : vector<1x256xf32> to vector<8x256xf32>
    %174 = vector.broadcast %172 : vector<8x1xf32> to vector<8x256xf32>
    %175 = arith.mulf %173, %174 : vector<8x256xf32>
    %176 = arith.addf %169, %175 : vector<8x256xf32>
    %177 = vector.extract_strided_slice %122 {offsets = [7, 0], sizes = [1, 256], strides = [1, 1]} : vector<8x256xf32> to vector<1x256xf32>
    %c3_70 = arith.constant 3 : index
    %c0_71 = arith.constant 0 : index
    %c0_72 = arith.constant 0 : index
    %178 = vector.load %arg4[%c3_70, %c0_71, %c0_72] : memref<4x8x1xf32, #tpu.memory_space<vmem>>, vector<1x8x1xf32>
    %179 = vector.shape_cast %178 : vector<1x8x1xf32> to vector<8x1xf32>
    %180 = vector.broadcast %177 : vector<1x256xf32> to vector<8x256xf32>
    %181 = vector.broadcast %179 : vector<8x1xf32> to vector<8x256xf32>
    %182 = arith.mulf %180, %181 : vector<8x256xf32>
    %183 = arith.addf %176, %182 : vector<8x256xf32>
    %cst_73 = arith.constant 0.000000e+00 : f32
    %184 = vector.broadcast %cst_73 : f32 to vector<8x256xf32>
    %185 = arith.maximumf %183, %184 : vector<8x256xf32>
    %c8_74 = arith.constant 8 : index
    %c0_75 = arith.constant 0 : index
    %186 = vector.load %arg5[%c8_74, %c0_75] : memref<16x256xf32, #tpu.memory_space<vmem>>, vector<8x256xf32>
    tpu.vector_store %arg5[%c8_74, %c0_75], %185 {strides = array<i32>} : memref<16x256xf32, #tpu.memory_space<vmem>>, vector<8x256xf32>,
    return
  }
  func.func @transform_0(%arg0: i32) -> (i32, i32) {
    %c0_i32 = arith.constant 0 : i32
    %c0_i32_0 = arith.constant 0 : i32
    %c0_i32_1 = arith.constant 0 : i32
    return %c0_i32, %c0_i32_0 : i32, i32
  }
  func.func @transform_1(%arg0: i32) -> (i32, i32, i32) {
    %c0_i32 = arith.constant 0 : i32
    %c0_i32_0 = arith.constant 0 : i32
    %c0_i32_1 = arith.constant 0 : i32
    %c0_i32_2 = arith.constant 0 : i32
    return %c0_i32, %c0_i32_0, %c0_i32_1 : i32, i32, i32
  }
  func.func @transform_2(%arg0: i32) -> (i32, i32) {
    %c0_i32 = arith.constant 0 : i32
    %c0_i32_0 = arith.constant 0 : i32
    %c0_i32_1 = arith.constant 0 : i32
    return %c0_i32, %c0_i32_0 : i32, i32
  }
  func.func @transform_3(%arg0: i32) -> (i32, i32, i32) {
    %c0_i32 = arith.constant 0 : i32
    %c0_i32_0 = arith.constant 0 : i32
    %c0_i32_1 = arith.constant 0 : i32
    %c0_i32_2 = arith.constant 0 : i32
    return %c0_i32, %c0_i32_0, %c0_i32_1 : i32, i32, i32
  }
  func.func @transform_4(%arg0: i32) -> (i32, i32) {
    %c0_i32 = arith.constant 0 : i32
    %c0_i32_0 = arith.constant 0 : i32
    %c0_i32_1 = arith.constant 0 : i32
    return %c0_i32, %c0_i32_0 : i32, i32
  }
}

</mosaic_0001>

<llo_original>
// kernel: tile.0
$region0: #{tile.0}
  %s0 = inlined_call_operand.vmem [shape: f32[2,4], index: 0, kind: input, shape index: {}]
  %s1 = inlined_call_operand.vmem [shape: f32[8,1], index: 1, kind: output, shape index: {}]
  $region1: #{tile.0} parent=0
    #allocation0 [shape = 'u8[4096]{0}', space=vmem, size = 0x1000, scoped, tag = 'scoped mem for input reshape']
    %s3 = sshll.u32 1, 2
    %s4 = ssub.s32 %s3, 1
    %v5 = vld [vmem:[%s0] sm:%s4]
    %6 = vst [vmem:[#allocation0] sm:%s4] %v5
    %v7 = vld [vmem:[#allocation0] sm:$0x3]
    %vm8 = vcmask 7168
    %9 = vst.msk [vmem:[%s1] ss:$4 sm:$0x3] %vm8, %v7
    %v10 = vld [vmem:[#allocation0] sm:$0x3]
    %11 = vrot.lane.b32.xlu0 %v10, 127
    %v12 = vpop.permute.xlu0 %11
    %vm13 = vcmask 7168
    %s14 = scalar_lea.vmem %s1, 1
    %15 = vst.msk [vmem:[%s14] ss:$4 sm:$0x3] %vm13, %v12
    %v16 = vld [vmem:[#allocation0] sm:$0x3]
    %17 = vrot.lane.b32.xlu0 %v16, 126
    %v18 = vpop.permute.xlu0 %17
    %vm19 = vcmask 7168
    %s20 = scalar_lea.vmem %s1, 2
    %21 = vst.msk [vmem:[%s20] ss:$4 sm:$0x3] %vm19, %v18
    %v22 = vld [vmem:[#allocation0] sm:$0x3]
    %23 = vrot.lane.b32.xlu0 %v22, 125
    %v24 = vpop.permute.xlu0 %23
    %vm25 = vcmask 7168
    %s26 = scalar_lea.vmem %s1, 3
    %27 = vst.msk [vmem:[%s26] ss:$4 sm:$0x3] %vm25, %v24

// kernel: tile.16
$region0: #{tile.16}
  #allocation0 [shape = 's32[1]{0}', space=sflag, size = 0x4, scoped, tag = 'scoped memory for tile.16']
  %s0 = inlined_call_operand.vmem [shape: f32[4], index: 0, kind: input, shape index: {}]
  %s1 = inlined_call_operand.vmem [shape: f32[2,4], index: 1, kind: output, shape index: {}]
  // Predicated region
  $region2: #{tile.16} parent=0 // pred_check
    _
  $region3: #{tile.16} parent=0 // pred_check_branch
    %3 = sbr.rel (0) target = $region5
  $region4: #{tile.16} parent=0 // pred_region
    _
  $region5: #{tile.16} parent=0 // pred_fallthru
    _
  %v4 = vld [vmem:[%s0] ss:$0 sm:$0xff]
  %5 = vst [vmem:[%s1] sm:$0x3] %v4

// kernel: block2_pallas.1
$region0: #{block2_pallas.1}
  #allocation0 [shape = 'u32[]', space=smem, size = 0x4, offset = 0x4, fixed_abs, tag = 'smem constant byte address 0x4 - core index']
  #allocation1 [shape = 'u32[144,128]{1,0:T(1,128)}', space=vmem, size = 0x12000, scoped, tag = 'internal scratch']
  %s0 = inlined_call_operand.vmem [shape: f32[8,256], index: 0, kind: input, shape index: {}]
  %s1 = inlined_call_operand.vmem [shape: f32[9,8,1], index: 1, kind: input, shape index: {}]
  %s2 = inlined_call_operand.vmem [shape: f32[8,1], index: 2, kind: input, shape index: {}]
  %s3 = inlined_call_operand.vmem [shape: f32[4,8,1], index: 3, kind: input, shape index: {}]
  %s4 = inlined_call_operand.vmem [shape: f32[16,256], index: 4, kind: output, shape index: {}]
  %s5 = sld [smem:[#allocation0]]
  $region26: #{block2_pallas.1} parent=0
    _
  %s7 = ssub.s32 1, %s5
  %s8 = scalar_select 0, %s7, %s5
  // Predicated region
  $region2: #{block2_pallas.1} parent=0 // pred_check
    _
  $region3: #{block2_pallas.1} parent=0 // pred_check_branch
    %10 = sbr.rel (0) target = $region5
  $region4: #{block2_pallas.1} parent=0 // pred_region
    _
  $region5: #{block2_pallas.1} parent=0 // pred_fallthru
    _
  // Predicated region
  $region6: #{block2_pallas.1} parent=0 // pred_check
    _
  $region7: #{block2_pallas.1} parent=0 // pred_check_branch
    %12 = sbr.rel (0) target = $region9
  $region8: #{block2_pallas.1} parent=0 // pred_region
    _
  $region9: #{block2_pallas.1} parent=0 // pred_fallthru
    _
  // Predicated region
  $region10: #{block2_pallas.1} parent=0 // pred_check
    _
  $region11: #{block2_pallas.1} parent=0 // pred_check_branch
    %14 = sbr.rel (0) target = $region13
  $region12: #{block2_pallas.1} parent=0 // pred_region
    _
  $region13: #{block2_pallas.1} parent=0 // pred_fallthru
    _
  // Predicated region
  $region14: #{block2_pallas.1} parent=0 // pred_check
    _
  $region15: #{block2_pallas.1} parent=0 // pred_check_branch
    %16 = sbr.rel (0) target = $region17
  $region16: #{block2_pallas.1} parent=0 // pred_region
    _
  $region17: #{block2_pallas.1} parent=0 // pred_fallthru
    _
  %v17 = vld [vmem:[%s0] sm:$0xff]
  %v18 = vld [vmem:[%s0 + $0x8] sm:$0xff]
  %v19 = vlaneseq
  %v20 = vand.u32 %v19, 127
  %v21 = vadd.s32 %v20, 128
  %v22 = vand.u32 %v20, 15
  %v23 = vand.u32 %v21, 15
  %24 = vrot.lane.b32.xlu0 %v17, 17
  %v25 = vpop.permute.xlu0 %24
  %26 = vrot.lane.b32.xlu0 %v18, 17
  %v27 = vpop.permute.xlu0 %26
  %vm28 = vcmp.lt.s32.totalorder %v20, 17
  %v29 = vsel %vm28, %v25, %v27
  %v30 = vsel %vm28, %v27, %v25
  %vm31 = vcmp.ge.s32.totalorder %v20, 16
  %vm32 = vcmp.ge.s32.totalorder %v21, 16
  %vm33 = vcmp.ge.s32.totalorder %v22, 1
  %vm34 = vcmp.ge.s32.totalorder %v23, 1
  %vm35 = vmand %vm31, %vm33
  %vm36 = vmand %vm32, %vm34
  %v37 = vsel %vm35, 1, 0
  %v38 = vsel %vm36, 1, 0
  %vm39 = vcmp.eq.s32.totalorder %v37, 1
  %vm40 = vcmp.eq.s32.totalorder %v38, 1
  %v41 = vsel %vm39, %v30, 0.0
  %v42 = vsel %vm40, %v29, 0.0
  %v43 = vld [vmem:[%s1] sm:$0xff]
  %45 = vset.pattern.permute.xlu0 0
  %46 = vperm.xlu0 %45, %v43
  %v47 = vpop.permute.xlu0 %46
  %v49 = vmul.f32 %v41, %v47
  %v50 = vmul.f32 %v42, %v47
  %v51 = vadd.f32 %v49, 0.0
  %v52 = vadd.f32 %v50, 0.0
  %53 = vrot.lane.b32.xlu0 %v17, 16
  %v54 = vpop.permute.xlu0 %53
  %55 = vrot.lane.b32.xlu0 %v18, 16
  %v56 = vpop.permute.xlu0 %55
  %vm57 = vcmp.lt.s32.totalorder %v20, 16
  %v58 = vsel %vm57, %v54, %v56
  %v59 = vsel %vm57, %v56, %v54
  %v60 = vsel %vm31, 1, 0
  %v61 = vsel %vm32, 1, 0
  %vm62 = vcmp.eq.s32.totalorder %v60, 1
  %vm63 = vcmp.eq.s32.totalorder %v61, 1
  %v64 = vsel %vm62, %v59, 0.0
  %v65 = vsel %vm63, %v58, 0.0
  %s66 = scalar_lea.vmem %s1, 8
  %v67 = vld [vmem:[%s66] sm:$0xff]
  %69 = vset.pattern.permute.xlu0 0
  %70 = vperm.xlu0 %69, %v67
  %v71 = vpop.permute.xlu0 %70
  %v73 = vmul.f32 %v64, %v71
  %v74 = vmul.f32 %v65, %v71
  %v75 = vadd.f32 %v51, %v73
  %v76 = vadd.f32 %v52, %v74
  %77 = vrot.lane.b32.xlu0 %v17, 15
  %v78 = vpop.permute.xlu0 %77
  %79 = vrot.lane.b32.xlu0 %v18, 15
  %v80 = vpop.permute.xlu0 %79
  %vm81 = vcmp.lt.s32.totalorder %v20, 15
  %v82 = vsel %vm81, %v78, %v80
  %v83 = vsel %vm81, %v80, %v78
  %vm84 = vcmp.lt.s32.totalorder %v22, 15
  %vm85 = vcmp.lt.s32.totalorder %v23, 15
  %vm86 = vmand %vm31, %vm84
  %vm87 = vmand %vm32, %vm85
  %v88 = vsel %vm86, 1, 0
  %v89 = vsel %vm87, 1, 0
  %vm90 = vcmp.eq.s32.totalorder %v88, 1
  %vm91 = vcmp.eq.s32.totalorder %v89, 1
  %v92 = vsel %vm90, %v83, 0.0
  %v93 = vsel %vm91, %v82, 0.0
  %s94 = scalar_lea.vmem %s1, 16
  %v95 = vld [vmem:[%s94] sm:$0xff]
  %97 = vset.pattern.permute.xlu0 0
  %98 = vperm.xlu0 %97, %v95
  %v99 = vpop.permute.xlu0 %98
  %v101 = vmul.f32 %v92, %v99
  %v102 = vmul.f32 %v93, %v99
  %v103 = vadd.f32 %v75, %v101
  %v104 = vadd.f32 %v76, %v102
  %105 = vrot.lane.b32.xlu0 %v17, 1
  %v106 = vpop.permute.xlu0 %105
  %107 = vrot.lane.b32.xlu0 %v18, 1
  %v108 = vpop.permute.xlu0 %107
  %vm109 = vcmp.lt.s32.totalorder %v20, 1
  %v110 = vsel %vm109, %v106, %v108
  %v111 = vsel %vm109, %v108, %v106
  %v112 = vsel %vm33, 1, 0
  %v113 = vsel %vm34, 1, 0
  %vm114 = vcmp.eq.s32.totalorder %v112, 1
  %vm115 = vcmp.eq.s32.totalorder %v113, 1
  %v116 = vsel %vm114, %v111, 0.0
  %v117 = vsel %vm115, %v110, 0.0
  %s118 = scalar_lea.vmem %s1, 24
  %v119 = vld [vmem:[%s118] sm:$0xff]
  %121 = vset.pattern.permute.xlu0 0
  %122 = vperm.xlu0 %121, %v119
  %v123 = vpop.permute.xlu0 %122
  %v125 = vmul.f32 %v116, %v123
  %v126 = vmul.f32 %v117, %v123
  %v127 = vadd.f32 %v103, %v125
  %v128 = vadd.f32 %v104, %v126
  %s129 = scalar_lea.vmem %s1, 32
  %v130 = vld [vmem:[%s129] sm:$0xff]
  %132 = vset.pattern.permute.xlu0 0
  %133 = vperm.xlu0 %132, %v130
  %v134 = vpop.permute.xlu0 %133
  %v136 = vmul.f32 %v17, %v134
  %v137 = vmul.f32 %v18, %v134
  %v138 = vadd.f32 %v127, %v136
  %v139 = vadd.f32 %v128, %v137
  %140 = vrot.lane.b32.xlu0 %v17, 127
  %v141 = vpop.permute.xlu0 %140
  %142 = vrot.lane.b32.xlu0 %v18, 127
  %v143 = vpop.permute.xlu0 %142
  %vm144 = vcmp.lt.s32.totalorder %v20, 127
  %v145 = vsel %vm144, %v141, %v143
  %v146 = vsel %vm144, %v143, %v141
  %v147 = vsel %vm84, 1, 0
  %v148 = vsel %vm85, 1, 0
  %vm149 = vcmp.eq.s32.totalorder %v147, 1
  %vm150 = vcmp.eq.s32.totalorder %v148, 1
  %v151 = vsel %vm149, %v145, 0.0
  %v152 = vsel %vm150, %v146, 0.0
  %s153 = scalar_lea.vmem %s1, 40
  %v154 = vld [vmem:[%s153] sm:$0xff]
  %156 = vset.pattern.permute.xlu0 0
  %157 = vperm.xlu0 %156, %v154
  %v158 = vpop.permute.xlu0 %157
  %v160 = vmul.f32 %v151, %v158
  %v161 = vmul.f32 %v152, %v158
  %v162 = vadd.f32 %v138, %v160
  %v163 = vadd.f32 %v139, %v161
  %164 = vrot.lane.b32.xlu0 %v17, 113
  %v165 = vpop.permute.xlu0 %164
  %166 = vrot.lane.b32.xlu0 %v18, 113
  %v167 = vpop.permute.xlu0 %166
  %vm168 = vcmp.lt.s32.totalorder %v20, 113
  %v169 = vsel %vm168, %v165, %v167
  %v170 = vsel %vm168, %v167, %v165
  %vm171 = vcmp.lt.s32.totalorder %v20, 240
  %vm172 = vcmp.lt.s32.totalorder %v21, 240
  %vm173 = vmand %vm171, %vm33
  %vm174 = vmand %vm172, %vm34
  %v175 = vsel %vm173, 1, 0
  %v176 = vsel %vm174, 1, 0
  %vm177 = vcmp.eq.s32.totalorder %v175, 1
  %vm178 = vcmp.eq.s32.totalorder %v176, 1
  %v179 = vsel %vm177, %v169, 0.0
  %v180 = vsel %vm178, %v170, 0.0
  %s181 = scalar_lea.vmem %s1, 48
  %v182 = vld [vmem:[%s181] sm:$0xff]
  %184 = vset.pattern.permute.xlu0 0
  %185 = vperm.xlu0 %184, %v182
  %v186 = vpop.permute.xlu0 %185
  %v188 = vmul.f32 %v179, %v186
  %v189 = vmul.f32 %v180, %v186
  %v190 = vadd.f32 %v162, %v188
  %v191 = vadd.f32 %v163, %v189
  %192 = vrot.lane.b32.xlu0 %v17, 112
  %v193 = vpop.permute.xlu0 %192
  %194 = vrot.lane.b32.xlu0 %v18, 112
  %v195 = vpop.permute.xlu0 %194
  %vm196 = vcmp.lt.s32.totalorder %v20, 112
  %v197 = vsel %vm196, %v193, %v195
  %v198 = vsel %vm196, %v195, %v193
  %v199 = vsel %vm171, 1, 0
  %v200 = vsel %vm172, 1, 0
  %vm201 = vcmp.eq.s32.totalorder %v199, 1
  %vm202 = vcmp.eq.s32.totalorder %v200, 1
  %v203 = vsel %vm201, %v197, 0.0
  %v204 = vsel %vm202, %v198, 0.0
  %s205 = scalar_lea.vmem %s1, 56
  %v206 = vld [vmem:[%s205] sm:$0xff]
  %208 = vset.pattern.permute.xlu0 0
  %209 = vperm.xlu0 %208, %v206
  %v210 = vpop.permute.xlu0 %209
  %v212 = vmul.f32 %v203, %v210
  %v213 = vmul.f32 %v204, %v210
  %v214 = vadd.f32 %v190, %v212
  %v215 = vadd.f32 %v191, %v213
  %216 = vrot.lane.b32.xlu0 %v17, 111
  %v217 = vpop.permute.xlu0 %216
  %218 = vrot.lane.b32.xlu0 %v18, 111
  %v219 = vpop.permute.xlu0 %218
  %vm220 = vcmp.lt.s32.totalorder %v20, 111
  %v221 = vsel %vm220, %v217, %v219
  %v222 = vsel %vm220, %v219, %v217
  %vm223 = vmand %vm171, %vm84
  %vm224 = vmand %vm172, %vm85
  %v225 = vsel %vm223, 1, 0
  %v226 = vsel %vm224, 1, 0
  %vm227 = vcmp.eq.s32.totalorder %v225, 1
  %vm228 = vcmp.eq.s32.totalorder %v226, 1
  %v229 = vsel %vm227, %v221, 0.0
  %v230 = vsel %vm228, %v222, 0.0
  %s231 = scalar_lea.vmem %s1, 64
  %v232 = vld [vmem:[%s231] sm:$0xff]
  %234 = vset.pattern.permute.xlu0 0
  %235 = vperm.xlu0 %234, %v232
  %v236 = vpop.permute.xlu0 %235
  %v238 = vmul.f32 %v229, %v236
  %v239 = vmul.f32 %v230, %v236
  %v240 = vadd.f32 %v214, %v238
  %v241 = vadd.f32 %v215, %v239
  %v242 = vld [vmem:[%s2] sm:$0xff]
  %244 = vset.pattern.permute.xlu0 0
  %245 = vperm.xlu0 %244, %v242
  %v246 = vpop.permute.xlu0 %245
  %v248 = vadd.f32 %v240, %v246
  %v249 = vadd.f32 %v241, %v246
  %v250 = vmax.f32 %v248, 0.0
  %v251 = vmax.f32 %v249, 0.0
  %v252 = vld [vmem:[%s3] sm:$0xff]
  %v253 = vlaneseq
  %v254 = vshrl.u32 %v253, 7
  %v255 = vsub.s32 0, %v254
  %v256 = vrot.slane %v250, %v255
  %v257 = vlaneseq
  %v258 = vshrl.u32 %v257, 7
  %v259 = vsub.s32 0, %v258
  %v260 = vrot.slane %v251, %v259
  %262 = vset.pattern.permute.xlu0 0
  %263 = vperm.xlu0 %262, %v252
  %v264 = vpop.permute.xlu0 %263
  %v266 = vmul.f32 %v256, %v264
  %v267 = vmul.f32 %v260, %v264
  %v268 = vadd.f32 %v266, 0.0
  %v269 = vadd.f32 %v267, 0.0
  %s270 = scalar_lea.vmem %s3, 8
  %v271 = vld [vmem:[%s270] sm:$0xff]
  %v272 = vlaneseq
  %v273 = vshrl.u32 %v272, 7
  %v274 = vsub.s32 1, %v273
  %v275 = vrot.slane %v250, %v274
  %v276 = vlaneseq
  %v277 = vshrl.u32 %v276, 7
  %v278 = vsub.s32 1, %v277
  %v279 = vrot.slane %v251, %v278
  %281 = vset.pattern.permute.xlu0 0
  %282 = vperm.xlu0 %281, %v271
  %v283 = vpop.permute.xlu0 %282
  %v285 = vmul.f32 %v275, %v283
  %v286 = vmul.f32 %v279, %v283
  %v287 = vadd.f32 %v268, %v285
  %v288 = vadd.f32 %v269, %v286
  %s289 = scalar_lea.vmem %s3, 16
  %v290 = vld [vmem:[%s289] sm:$0xff]
  %v291 = vlaneseq
  %v292 = vshrl.u32 %v291, 7
  %v293 = vsub.s32 2, %v292
  %v294 = vrot.slane %v250, %v293
  %v295 = vlaneseq
  %v296 = vshrl.u32 %v295, 7
  %v297 = vsub.s32 2, %v296
  %v298 = vrot.slane %v251, %v297
  %300 = vset.pattern.permute.xlu0 0
  %301 = vperm.xlu0 %300, %v290
  %v302 = vpop.permute.xlu0 %301
  %v304 = vmul.f32 %v294, %v302
  %v305 = vmul.f32 %v298, %v302
  %v306 = vadd.f32 %v287, %v304
  %v307 = vadd.f32 %v288, %v305
  %s308 = scalar_lea.vmem %s3, 24
  %v309 = vld [vmem:[%s308] sm:$0xff]
  %v310 = vlaneseq
  %v311 = vshrl.u32 %v310, 7
  %v312 = vsub.s32 3, %v311
  %v313 = vrot.slane %v250, %v312
  %v314 = vlaneseq
  %v315 = vshrl.u32 %v314, 7
  %v316 = vsub.s32 3, %v315
  %v317 = vrot.slane %v251, %v316
  %319 = vset.pattern.permute.xlu0 0
  %320 = vperm.xlu0 %319, %v309
  %v321 = vpop.permute.xlu0 %320
  %v323 = vmul.f32 %v313, %v321
  %v324 = vmul.f32 %v317, %v321
  %v325 = vadd.f32 %v306, %v323
  %v326 = vadd.f32 %v307, %v324
  %v327 = vmax.f32 %v325, 0.0
  %v328 = vmax.f32 %v326, 0.0
  %329 = vst [vmem:[%s4] sm:$0xff] %v327
  %330 = vst [vmem:[%s4 + $0x8] sm:$0xff] %v328
  %v331 = vld [vmem:[%s3] sm:$0xff]
  %v332 = vlaneseq
  %v333 = vshrl.u32 %v332, 7
  %v334 = vsub.s32 4, %v333
  %v335 = vrot.slane %v250, %v334
  %v336 = vlaneseq
  %v337 = vshrl.u32 %v336, 7
  %v338 = vsub.s32 4, %v337
  %v339 = vrot.slane %v251, %v338
  %341 = vset.pattern.permute.xlu0 0
  %342 = vperm.xlu0 %341, %v331
  %v343 = vpop.permute.xlu0 %342
  %v345 = vmul.f32 %v335, %v343
  %v346 = vmul.f32 %v339, %v343
  %v347 = vadd.f32 %v345, 0.0
  %v348 = vadd.f32 %v346, 0.0
  %v349 = vld [vmem:[%s270] sm:$0xff]
  %v350 = vlaneseq
  %v351 = vshrl.u32 %v350, 7
  %v352 = vsub.s32 5, %v351
  %v353 = vrot.slane %v250, %v352
  %v354 = vlaneseq
  %v355 = vshrl.u32 %v354, 7
  %v356 = vsub.s32 5, %v355
  %v357 = vrot.slane %v251, %v356
  %359 = vset.pattern.permute.xlu0 0
  %360 = vperm.xlu0 %359, %v349
  %v361 = vpop.permute.xlu0 %360
  %v363 = vmul.f32 %v353, %v361
  %v364 = vmul.f32 %v357, %v361
  %v365 = vadd.f32 %v347, %v363
  %v366 = vadd.f32 %v348, %v364
  %v367 = vld [vmem:[%s289] sm:$0xff]
  %v368 = vlaneseq
  %v369 = vshrl.u32 %v368, 7
  %v370 = vsub.s32 6, %v369
  %v371 = vrot.slane %v250, %v370
  %v372 = vlaneseq
  %v373 = vshrl.u32 %v372, 7
  %v374 = vsub.s32 6, %v373
  %v375 = vrot.slane %v251, %v374
  %377 = vset.pattern.permute.xlu0 0
  %378 = vperm.xlu0 %377, %v367
  %v379 = vpop.permute.xlu0 %378
  %v381 = vmul.f32 %v371, %v379
  %v382 = vmul.f32 %v375, %v379
  %v383 = vadd.f32 %v365, %v381
  %v384 = vadd.f32 %v366, %v382
  %v385 = vld [vmem:[%s308] sm:$0xff]
  %v386 = vlaneseq
  %v387 = vshrl.u32 %v386, 7
  %v388 = vsub.s32 7, %v387
  %v389 = vrot.slane %v250, %v388
  %v390 = vlaneseq
  %v391 = vshrl.u32 %v390, 7
  %v392 = vsub.s32 7, %v391
  %v393 = vrot.slane %v251, %v392
  %395 = vset.pattern.permute.xlu0 0
  %396 = vperm.xlu0 %395, %v385
  %v397 = vpop.permute.xlu0 %396
  %v399 = vmul.f32 %v389, %v397
  %v400 = vmul.f32 %v393, %v397
  %v401 = vadd.f32 %v383, %v399
  %v402 = vadd.f32 %v384, %v400
  %v403 = vmax.f32 %v401, 0.0
  %v404 = vmax.f32 %v402, 0.0
  %405 = vst [vmem:[%s4 + $0x10] sm:$0xff] %v403
  %406 = vst [vmem:[%s4 + $0x18] sm:$0xff] %v404
  // Predicated region
  $region18: #{block2_pallas.1} parent=0 // pred_check
    _
  $region19: #{block2_pallas.1} parent=0 // pred_check_branch
    %408 = sbr.rel (0) target = $region21
  $region20: #{block2_pallas.1} parent=0 // pred_region
    _
  $region21: #{block2_pallas.1} parent=0 // pred_fallthru
    _
  // Predicated region
  $region22: #{block2_pallas.1} parent=0 // pred_check
    _
  $region23: #{block2_pallas.1} parent=0 // pred_check_branch
    %410 = sbr.rel (0) target = $region25
  $region24: #{block2_pallas.1} parent=0 // pred_region
    _
  $region25: #{block2_pallas.1} parent=0 // pred_fallthru
    _

</llo_original>
